<compile_context>
chip_gen: v7x
topology: tpu7x:2x2x1
jax: 0.10.0
libtpu: 0.0.40
codegen_flags: <defaults>
</compile_context>

<pallas_src>
import jax
import jax.numpy as jnp
from jax.experimental import pallas as pl
from jax.experimental.pallas import tpu as pltpu


def _make_concat5_kernel(c_list, k, hw, bt):
    """Kernel body for fixed per-input channel counts, output channels and tile."""
    c_total = sum(c_list)
    n_in = len(c_list)
    shift = c_total - k  # tail length; dest(rank >= k) = rank - shift

    def kernel(*refs):
        x_refs = refs[:n_in]
        o_ref = refs[n_in]
        xcat_ref = refs[n_in + 1]
        dtype = x_refs[0].dtype

        # ---- loop-invariant constants (hoisted: JAX does not CSE broadcasts) --
        ones_mat = jnp.ones((c_total, hw), dtype)                     # MXU pooling
        sub = jax.lax.broadcasted_iota(jnp.int32, (c_total, c_total), 0)   # c'
        lane = jax.lax.broadcasted_iota(jnp.int32, (c_total, c_total), 1)  # c
        eye_f = (sub == lane).astype(jnp.float32)                     # tiny identity
        rows_k = jax.lax.broadcasted_iota(jnp.int32, (k, c_total), 0)

        # Static unroll over the images of this grid step (bt is small & static).
        for bi in range(bt):
            # -- 1) stage this image's inputs into one contiguous (C, hw) tile --
            if n_in == 1:
                x_cat = x_refs[0][bi]
            else:
                off = 0
                for j, cj in enumerate(c_list):
                    xcat_ref[pl.ds(off, cj), :] = x_refs[j][bi]
                    off += cj
                x_cat = xcat_ref[...]                                  # (C, hw)

            # -- 2) per-channel spatial sums on the MXU, in both orientations.
            #    (Sums rank identically to means, so the 1/hw factor is skipped.)
            #    p_lane[c', c] = sum_s x[c, s]   (value varies along lanes)
            p_lane = jax.lax.dot_general(
                ones_mat, x_cat, (((1,), (1,)), ((), ())),
                preferred_element_type=jnp.float32)                   # (C, C)
            #    p_sub[c', c] = p_lane[c, c'] = sum_s x[c', s]  (exact 0/1-identity
            #    dot, so both orientations hold bit-identical values -> the rank
            #    below is a self-consistent permutation).
            p_sub = jax.lax.dot_general(
                eye_f, p_lane, (((1,), (1,)), ((), ())),
                preferred_element_type=jnp.float32)                   # (C, C)

            # -- 3) dense descending rank with a stable tie-break (lower channel
            #    index first, matching a stable argsort of -pooled):
            #    rank(c) = #{p[c'] > p[c]} + #{p[c'] == p[c] and c' < c}
            gt = p_sub > p_lane
            tie = (p_sub == p_lane) & (sub < lane)
            rank = jnp.sum((gt | tie).astype(jnp.int32),
                           axis=0, keepdims=True)                     # (1, C)

            # -- 4) destination head row: pure copy for rank < k, tail-add else --
            dest = jnp.where(rank < k, rank, rank - shift)            # (1, C)
            sel = (rows_k == dest).astype(x_cat.dtype)                # (k, C) 0/1

            # -- 5) permutation + tail fold as ONE MXU matmul, no accumulator --
            out = jnp.dot(sel, x_cat, preferred_element_type=jnp.float32)
            o_ref[bi] = out.astype(o_ref.dtype)

    return kernel


def concat5_forward(x_list, c2, dimension=1, batch_tile=None):
    """Concat5.forward: list of NCHW tensors -> (B, c2, H, W)."""
    assert dimension == 1, "Concat5 kernel only supports channel concat (d=1)"
    b = int(x_list[0].shape[0])
    h, w = int(x_list[0].shape[2]), int(x_list[0].shape[3])
    c_list = tuple(int(x.shape[1]) for x in x_list)
    c_total = sum(c_list)
    k = int(c2)
    # The torch code's negative-index += requires C - k <= k <= C.
    assert 0 < k <= c_total and (c_total - k) <= k
    hw = h * w

    if batch_tile is None:
        # Demo-size default: whole batch in ONE grid step (per-step overhead
        # dominates the few KiB of HBM traffic; v5e/v6e have a single TC so a
        # parallel batch axis buys nothing here).  For production sizes on v7x
        # pass batch_tile <= ceil(b/2) so the "parallel" axis has >= 2 steps
        # feeding both TensorCores; at production H*W also add an hw grid axis
        # (keep it a multiple of 128) with dest precomputed via scalar prefetch.
        batch_tile = b
    bt = max(1, min(int(batch_tile), b))
    assert b % bt == 0, "batch_tile must divide the batch size"
    num_steps = b // bt

    # (B, Ci, H, W) -> (B, Ci, H*W): trailing-dim merge only (no transpose, no
    # concatenate, no extra HBM round trip); spatial sits on the lane axis.
    x_flat = [x.reshape(b, ci, hw) for x, ci in zip(x_list, c_list)]
    dtype = x_flat[0].dtype

    kernel = _make_concat5_kernel(c_list, k, hw, bt)
    out = pl.pallas_call(
        kernel,
        out_shape=jax.ShapeDtypeStruct((b, k, hw), dtype),
        grid_spec=pltpu.PrefetchScalarGridSpec(
            num_scalar_prefetch=0,
            grid=(num_steps,),
            in_specs=[pl.BlockSpec((bt, ci, hw), lambda s: (s, 0, 0))
                      for ci in c_list],
            out_specs=pl.BlockSpec((bt, k, hw), lambda s: (s, 0, 0)),
            scratch_shapes=[pltpu.VMEM((c_total, hw), dtype)],
        ),
        compiler_params=pltpu.CompilerParams(
            dimension_semantics=("parallel",),
            # Demo blocks are tiny; at production H*W keep
            # 2*(C_total + k)*hw_tile*itemsize well under v7x's 64 MiB VMEM.
            vmem_limit_bytes=32 * 1024 * 1024,
        ),
    )(*x_flat)

    return out.reshape(b, k, h, w)


def _reference(x_list, c2, dimension=1):
    """Pure-JAX port of the PyTorch Concat5.forward."""
    x = jnp.concatenate(x_list, axis=dimension)
    b, c, h, w = x.shape
    pooled = jnp.mean(x, axis=(2, 3))                      # (B, C)
    order = jnp.argsort(-pooled, axis=1)                   # descending, stable
    xs = jnp.take_along_axis(x, order[:, :, None, None], axis=1)
    head = xs[:, :c2]
    tail = xs[:, c2:]
    return head.at[:, 2 * c2 - c:, :, :].add(tail)


if __name__ == "__main__":
    # Two 4-channel inputs -> C = 8 after the (virtual) concat, c2 = 6 output
    # channels (exercises both pure-copy and tail-added head channels),
    # spatial 16x16 (H*W = 256 lanes), batch 2 (merged into one grid step).
    B, C0, C1, H, W = 2, 4, 4, 16, 16
    C2 = 6

    key = jax.random.PRNGKey(0)
    k0, k1 = jax.random.split(key)
    x0 = jax.random.normal(k0, (B, C0, H, W), dtype=jnp.float32)
    x1 = jax.random.normal(k1, (B, C1, H, W), dtype=jnp.float32)

    y = concat5_forward([x0, x1], C2)
    y = jax.block_until_ready(y)

    y_ref = _reference([x0, x1], C2)
    assert y.shape == (B, C2, H, W)
    err = float(jnp.max(jnp.abs(y - y_ref)))
    assert err < 1e-4, err

    print("KERNEL_OK")
</pallas_src>

<mosaic_0001>
module attributes {stable_mosaic.version = 11 : i64} {
  func.func @kernel(%arg0: i32, %arg1: memref<2x4x256xf32, #tpu.memory_space<vmem>>, %arg2: memref<2x4x256xf32, #tpu.memory_space<vmem>>, %arg3: memref<2x6x256xf32, #tpu.memory_space<vmem>>, %arg4: memref<8x256xf32, #tpu.memory_space<vmem>>) attributes {dimension_semantics = [#tpu.dimension_semantics<parallel>], iteration_bounds = array<i64: 1>, scalar_prefetch = 0 : i64, scratch_operands = 1 : i64, tpu.core_type = #tpu.core_type<tc>, window_params = [{transform_indices = @transform_0, window_bounds = array<i64: 2, 4, 256>}, {transform_indices = @transform_1, window_bounds = array<i64: 2, 4, 256>}, {transform_indices = @transform_2, window_bounds = array<i64: 2, 6, 256>}]} {
    %cst = arith.constant 1.000000e+00 : f32
    %0 = vector.broadcast %cst : f32 to vector<8x256xf32>
    %1 = tpu.iota {dimensions = array<i32: 0>} : vector<8x8xi32>
    %2 = tpu.iota {dimensions = array<i32: 1>} : vector<8x8xi32>
    %3 = arith.cmpi eq, %1, %2 : vector<8x8xi32>
    %4 = arith.extui %3 : vector<8x8xi1> to vector<8x8xi32>
    %5 = arith.sitofp %4 : vector<8x8xi32> to vector<8x8xf32>
    %6 = tpu.iota {dimensions = array<i32: 0>} : vector<6x8xi32>
    %c0 = arith.constant 0 : index
    %c0_0 = arith.constant 0 : index
    %c0_1 = arith.constant 0 : index
    %7 = vector.load %arg1[%c0, %c0_0, %c0_1] : memref<2x4x256xf32, #tpu.memory_space<vmem>>, vector<1x4x256xf32>
    %8 = vector.shape_cast %7 : vector<1x4x256xf32> to vector<4x256xf32>
    %c0_2 = arith.constant 0 : index
    %c0_3 = arith.constant 0 : index
    %9 = vector.load %arg4[%c0_2, %c0_3] : memref<8x256xf32, #tpu.memory_space<vmem>>, vector<4x256xf32>
    tpu.vector_store %arg4[%c0_2, %c0_3], %8 {strides = array<i32>} : memref<8x256xf32, #tpu.memory_space<vmem>>, vector<4x256xf32>,
    %c0_4 = arith.constant 0 : index
    %c0_5 = arith.constant 0 : index
    %c0_6 = arith.constant 0 : index
    %10 = vector.load %arg2[%c0_4, %c0_5, %c0_6] : memref<2x4x256xf32, #tpu.memory_space<vmem>>, vector<1x4x256xf32>
    %11 = vector.shape_cast %10 : vector<1x4x256xf32> to vector<4x256xf32>
    %c4 = arith.constant 4 : index
    %c0_7 = arith.constant 0 : index
    %12 = vector.load %arg4[%c4, %c0_7] : memref<8x256xf32, #tpu.memory_space<vmem>>, vector<4x256xf32>
    tpu.vector_store %arg4[%c4, %c0_7], %11 {strides = array<i32>} : memref<8x256xf32, #tpu.memory_space<vmem>>, vector<4x256xf32>,
    %c0_8 = arith.constant 0 : index
    %c0_9 = arith.constant 0 : index
    %13 = vector.load %arg4[%c0_8, %c0_9] : memref<8x256xf32, #tpu.memory_space<vmem>>, vector<8x256xf32>
    %cst_10 = arith.constant dense<0.000000e+00> : vector<8x8xf32>
    %14 = tpu.matmul %0, %13, %cst_10 {dimension_numbers = #tpu.dot_dimension_numbers<[1], [1], [0], [0], [0, 0, 1, 0], [], []>} : vector<8x256xf32>, vector<8x256xf32>, vector<8x8xf32> -> vector<8x8xf32>
    %cst_11 = arith.constant dense<0.000000e+00> : vector<8x8xf32>
    %15 = tpu.matmul %5, %14, %cst_11 {dimension_numbers = #tpu.dot_dimension_numbers<[1], [1], [0], [0], [0, 0, 1, 0], [], []>} : vector<8x8xf32>, vector<8x8xf32>, vector<8x8xf32> -> vector<8x8xf32>
    %16 = arith.cmpf ogt, %15, %14 : vector<8x8xf32>
    %17 = arith.cmpf oeq, %15, %14 : vector<8x8xf32>
    %18 = arith.cmpi slt, %1, %2 : vector<8x8xi32>
    %19 = arith.andi %17, %18 : vector<8x8xi1>
    %20 = arith.ori %16, %19 : vector<8x8xi1>
    %21 = arith.extui %20 : vector<8x8xi1> to vector<8x8xi32>
    %cst_12 = arith.constant dense<0> : vector<8xi32>
    %22 = vector.multi_reduction <add>, %21, %cst_12 [0] : vector<8x8xi32> to vector<8xi32>
    %23 = vector.shape_cast %22 : vector<8xi32> to vector<1x8xi32>
    %c6_i32 = arith.constant 6 : i32
    %24 = vector.broadcast %c6_i32 : i32 to vector<1x8xi32>
    %25 = arith.cmpi slt, %23, %24 : vector<1x8xi32>
    %c2_i32 = arith.constant 2 : i32
    %26 = vector.broadcast %c2_i32 : i32 to vector<1x8xi32>
    %27 = arith.subi %23, %26 : vector<1x8xi32>
    %28 = arith.select %25, %23, %27 : vector<1x8xi1>, vector<1x8xi32>
    %29 = vector.broadcast %28 : vector<1x8xi32> to vector<6x8xi32>
    %30 = arith.cmpi eq, %6, %29 : vector<6x8xi32>
    %31 = arith.extui %30 : vector<6x8xi1> to vector<6x8xi32>
    %32 = arith.sitofp %31 : vector<6x8xi32> to vector<6x8xf32>
    %cst_13 = arith.constant dense<0.000000e+00> : vector<6x256xf32>
    %33 = tpu.matmul %32, %13, %cst_13 {dimension_numbers = #tpu.dot_dimension_numbers<[1], [0], [0], [1], [0, 0, 1, 1], [], []>} : vector<6x8xf32>, vector<8x256xf32>, vector<6x256xf32> -> vector<6x256xf32>
    %c0_14 = arith.constant 0 : index
    %c0_15 = arith.constant 0 : index
    %c0_16 = arith.constant 0 : index
    %34 = vector.load %arg3[%c0_14, %c0_15, %c0_16] : memref<2x6x256xf32, #tpu.memory_space<vmem>>, vector<1x6x256xf32>
    %35 = vector.shape_cast %34 : vector<1x6x256xf32> to vector<6x256xf32>
    %36 = vector.shape_cast %33 : vector<6x256xf32> to vector<1x6x256xf32>
    tpu.vector_store %arg3[%c0_14, %c0_15, %c0_16], %36 {strides = array<i32>} : memref<2x6x256xf32, #tpu.memory_space<vmem>>, vector<1x6x256xf32>,
    %c1 = arith.constant 1 : index
    %c0_17 = arith.constant 0 : index
    %c0_18 = arith.constant 0 : index
    %37 = vector.load %arg1[%c1, %c0_17, %c0_18] : memref<2x4x256xf32, #tpu.memory_space<vmem>>, vector<1x4x256xf32>
    %38 = vector.shape_cast %37 : vector<1x4x256xf32> to vector<4x256xf32>
    %c0_19 = arith.constant 0 : index
    %c0_20 = arith.constant 0 : index
    %39 = vector.load %arg4[%c0_19, %c0_20] : memref<8x256xf32, #tpu.memory_space<vmem>>, vector<4x256xf32>
    tpu.vector_store %arg4[%c0_19, %c0_20], %38 {strides = array<i32>} : memref<8x256xf32, #tpu.memory_space<vmem>>, vector<4x256xf32>,
    %c1_21 = arith.constant 1 : index
    %c0_22 = arith.constant 0 : index
    %c0_23 = arith.constant 0 : index
    %40 = vector.load %arg2[%c1_21, %c0_22, %c0_23] : memref<2x4x256xf32, #tpu.memory_space<vmem>>, vector<1x4x256xf32>
    %41 = vector.shape_cast %40 : vector<1x4x256xf32> to vector<4x256xf32>
    %c4_24 = arith.constant 4 : index
    %c0_25 = arith.constant 0 : index
    %42 = vector.load %arg4[%c4_24, %c0_25] : memref<8x256xf32, #tpu.memory_space<vmem>>, vector<4x256xf32>
    tpu.vector_store %arg4[%c4_24, %c0_25], %41 {strides = array<i32>} : memref<8x256xf32, #tpu.memory_space<vmem>>, vector<4x256xf32>,
    %c0_26 = arith.constant 0 : index
    %c0_27 = arith.constant 0 : index
    %43 = vector.load %arg4[%c0_26, %c0_27] : memref<8x256xf32, #tpu.memory_space<vmem>>, vector<8x256xf32>
    %cst_28 = arith.constant dense<0.000000e+00> : vector<8x8xf32>
    %44 = tpu.matmul %0, %43, %cst_28 {dimension_numbers = #tpu.dot_dimension_numbers<[1], [1], [0], [0], [0, 0, 1, 0], [], []>} : vector<8x256xf32>, vector<8x256xf32>, vector<8x8xf32> -> vector<8x8xf32>
    %cst_29 = arith.constant dense<0.000000e+00> : vector<8x8xf32>
    %45 = tpu.matmul %5, %44, %cst_29 {dimension_numbers = #tpu.dot_dimension_numbers<[1], [1], [0], [0], [0, 0, 1, 0], [], []>} : vector<8x8xf32>, vector<8x8xf32>, vector<8x8xf32> -> vector<8x8xf32>
    %46 = arith.cmpf ogt, %45, %44 : vector<8x8xf32>
    %47 = arith.cmpf oeq, %45, %44 : vector<8x8xf32>
    %48 = arith.cmpi slt, %1, %2 : vector<8x8xi32>
    %49 = arith.andi %47, %48 : vector<8x8xi1>
    %50 = arith.ori %46, %49 : vector<8x8xi1>
    %51 = arith.extui %50 : vector<8x8xi1> to vector<8x8xi32>
    %cst_30 = arith.constant dense<0> : vector<8xi32>
    %52 = vector.multi_reduction <add>, %51, %cst_30 [0] : vector<8x8xi32> to vector<8xi32>
    %53 = vector.shape_cast %52 : vector<8xi32> to vector<1x8xi32>
    %c6_i32_31 = arith.constant 6 : i32
    %54 = vector.broadcast %c6_i32_31 : i32 to vector<1x8xi32>
    %55 = arith.cmpi slt, %53, %54 : vector<1x8xi32>
    %c2_i32_32 = arith.constant 2 : i32
    %56 = vector.broadcast %c2_i32_32 : i32 to vector<1x8xi32>
    %57 = arith.subi %53, %56 : vector<1x8xi32>
    %58 = arith.select %55, %53, %57 : vector<1x8xi1>, vector<1x8xi32>
    %59 = vector.broadcast %58 : vector<1x8xi32> to vector<6x8xi32>
    %60 = arith.cmpi eq, %6, %59 : vector<6x8xi32>
    %61 = arith.extui %60 : vector<6x8xi1> to vector<6x8xi32>
    %62 = arith.sitofp %61 : vector<6x8xi32> to vector<6x8xf32>
    %cst_33 = arith.constant dense<0.000000e+00> : vector<6x256xf32>
    %63 = tpu.matmul %62, %43, %cst_33 {dimension_numbers = #tpu.dot_dimension_numbers<[1], [0], [0], [1], [0, 0, 1, 1], [], []>} : vector<6x8xf32>, vector<8x256xf32>, vector<6x256xf32> -> vector<6x256xf32>
    %c1_34 = arith.constant 1 : index
    %c0_35 = arith.constant 0 : index
    %c0_36 = arith.constant 0 : index
    %64 = vector.load %arg3[%c1_34, %c0_35, %c0_36] : memref<2x6x256xf32, #tpu.memory_space<vmem>>, vector<1x6x256xf32>
    %65 = vector.shape_cast %64 : vector<1x6x256xf32> to vector<6x256xf32>
    %66 = vector.shape_cast %63 : vector<6x256xf32> to vector<1x6x256xf32>
    tpu.vector_store %arg3[%c1_34, %c0_35, %c0_36], %66 {strides = array<i32>} : memref<2x6x256xf32, #tpu.memory_space<vmem>>, vector<1x6x256xf32>,
    return
  }
  func.func @transform_0(%arg0: i32) -> (i32, i32, i32) {
    %c0_i32 = arith.constant 0 : i32
    %c0_i32_0 = arith.constant 0 : i32
    %c0_i32_1 = arith.constant 0 : i32
    return %arg0, %c0_i32, %c0_i32_0 : i32, i32, i32
  }
  func.func @transform_1(%arg0: i32) -> (i32, i32, i32) {
    %c0_i32 = arith.constant 0 : i32
    %c0_i32_0 = arith.constant 0 : i32
    %c0_i32_1 = arith.constant 0 : i32
    return %arg0, %c0_i32, %c0_i32_0 : i32, i32, i32
  }
  func.func @transform_2(%arg0: i32) -> (i32, i32, i32) {
    %c0_i32 = arith.constant 0 : i32
    %c0_i32_0 = arith.constant 0 : i32
    %c0_i32_1 = arith.constant 0 : i32
    return %arg0, %c0_i32, %c0_i32_0 : i32, i32, i32
  }
}

</mosaic_0001>

<llo_original>
// kernel: tpu_custom_call.1
$region0: #{tpu_custom_call.1}
  #allocation0 [shape = 'u32[]', space=smem, size = 0x4, offset = 0x4, fixed_abs, tag = 'smem constant byte address 0x4 - core index']
  #allocation1 [shape = 'u32[144,128]{1,0:T(1,128)}', space=vmem, size = 0x12000, scoped, tag = 'internal scratch']
  #allocation2 [shape = 'f32[8,256]{1,0:T(8,128)}', space=vmem, size = 0x2000, scoped, tag = 'scratch operand']
  %s0 = inlined_call_operand.hbm [shape: f32[2,4,256], index: 0, kind: input, shape index: {}]
  %s1 = inlined_call_operand.hbm [shape: f32[2,4,256], index: 1, kind: input, shape index: {}]
  %s2 = inlined_call_operand.vmem [shape: f32[2,6,256], index: 2, kind: output, shape index: {}]
  %s3 = sld [smem:[#allocation0]]
  $region26: #{tpu_custom_call.1} parent=0
    _
  %s5 = ssub.s32 1, %s3
  %s6 = scalar_select 0, %s5, %s3
  $region1: #{tpu_custom_call.1} parent=0
    #allocation3 [shape = 'u8[8192]{0}', space=vmem, size = 0x2000, scoped, tag = 'input window, operand 0, single buffered']
    #allocation4 [shape = 's32[1]{0}', space=sflag, size = 0x4, scoped, tag = 'scoped memory for tpu_custom_call.1']
    #allocation5 [shape = 'u8[8192]{0}', space=vmem, size = 0x2000, scoped, tag = 'input window, operand 1, single buffered']
    #allocation6 [shape = 's32[1]{0}', space=sflag, size = 0x4, scoped, tag = 'scoped memory for tpu_custom_call.1']
    %7 = vsyncpa [#allocation4], 0
    %8 = vsyncpa [#allocation6], 0
    // Predicated region
    $region2: #{tpu_custom_call.1} parent=1 // pred_check
      _
    $region3: #{tpu_custom_call.1} parent=1 // pred_check_branch
      %10 = sbr.rel (0) target = $region5
    $region4: #{tpu_custom_call.1} parent=1 // pred_region
      %s12 = ssub.s32 256, 256
      %13 = vsyncadd [#allocation4], %s12
      %s14 = sshll.u32 [#allocation3], 4
      %s15 = int_to_ptr.vmem [resolvable:$true] %s14
      %20 = dma.hbm_to_vmem [thread:$0]  %s0, 256, %s15, [#allocation4], 128, 128, 8
    $region5: #{tpu_custom_call.1} parent=1 // pred_fallthru
      _
    // Predicated region
    $region6: #{tpu_custom_call.1} parent=1 // pred_check
      _
    $region7: #{tpu_custom_call.1} parent=1 // pred_check_branch
      %22 = sbr.rel (0) target = $region9
    $region8: #{tpu_custom_call.1} parent=1 // pred_region
      %s24 = ssub.s32 256, 256
      %25 = vsyncadd [#allocation6], %s24
      %s26 = sshll.u32 [#allocation5], 4
      %s27 = int_to_ptr.vmem [resolvable:$true] %s26
      %32 = dma.hbm_to_vmem [thread:$0]  %s1, 256, %s27, [#allocation6], 128, 128, 8
    $region9: #{tpu_custom_call.1} parent=1 // pred_fallthru
      _
    // Predicated region
    $region10: #{tpu_custom_call.1} parent=1 // pred_check
      _
    $region11: #{tpu_custom_call.1} parent=1 // pred_check_branch
      %34 = sbr.rel (0) target = $region13
    $region12: #{tpu_custom_call.1} parent=1 // pred_region
      %35 = dma.done [#allocation4], 256
    $region13: #{tpu_custom_call.1} parent=1 // pred_fallthru
      _
    // Predicated region
    $region14: #{tpu_custom_call.1} parent=1 // pred_check
      _
    $region15: #{tpu_custom_call.1} parent=1 // pred_check_branch
      %37 = sbr.rel (0) target = $region17
    $region16: #{tpu_custom_call.1} parent=1 // pred_region
      %38 = dma.done [#allocation6], 256
    $region17: #{tpu_custom_call.1} parent=1 // pred_fallthru
      _
    %v39 = vlaneseq
    %v40 = vshrl.u32 %v39, 7
    %v41 = vlaneseq
    %v42 = vand.u32 %v41, 127
    %vm43 = vcmp.eq.s32.totalorder %v40, %v42
    %v44 = vsel %vm43, 1, 0
    %v45 = vcvt.s32.f32 %v44
    %v46 = vld [vmem:[#allocation3] sm:$0xff]
    %v48 = vcombine.high %v46, %v46
    %50 = vst [vmem:[#allocation2] sm:$0xf] %v46
    %51 = vst [vmem:[#allocation2 + $0x8] sm:$0xf] %v48
    %v52 = vld [vmem:[#allocation5] sm:$0xff]
    %v54 = vcombine.low %v52, %v52
    %56 = vst [vmem:[#allocation2] sm:$0xf0] %v54
    %57 = vst [vmem:[#allocation2 + $0x8] sm:$0xf0] %v52
    %v58 = vld [vmem:[#allocation2] sm:$0xff]
    %v59 = vld [vmem:[#allocation2 + $0x8] sm:$0xff]
    %60 = vmatprep.subr.mxu0 %v59
    %61 = vmatpush1.xpose.msra.mxu0 %v58
    %62 = vmatprep.subr.mxu0 0.0
    %63 = vmatpush1.xpose.msra.mxu0 0.0
    %64 = vmatprep.subr.mxu0 0.0
    %65 = vmatpush1.xpose.msra.mxu0 0.0
    %66 = vmatprep.subr.mxu0 0.0
    %67 = vmatpush1.xpose.msra.mxu0 0.0
    %68 = vmatprep.subr.mxu0 0.0
    %69 = vmatpush1.xpose.msra.mxu0 0.0
    %70 = vmatprep.subr.mxu0 0.0
    %71 = vmatpush1.xpose.msra.mxu0 0.0
    %72 = vmatprep.subr.mxu0 0.0
    %73 = vmatpush1.xpose.msra.mxu0 0.0
    %74 = vmatprep.subr.mxu0 0.0
    %75 = vmatpush1.xpose.msra.mxu0 0.0
    %76 = vmatprep.subr.mxu0 0.0
    %77 = vmatpush1.xpose.msra.mxu0 0.0
    %78 = vmatprep.subr.mxu0 0.0
    %79 = vmatpush1.xpose.msra.mxu0 0.0
    %80 = vmatprep.subr.mxu0 0.0
    %81 = vmatpush1.xpose.msra.mxu0 0.0
    %82 = vmatprep.subr.mxu0 0.0
    %83 = vmatpush1.xpose.msra.mxu0 0.0
    %84 = vmatprep.subr.mxu0 0.0
    %85 = vmatpush1.xpose.msra.mxu0 0.0
    %86 = vmatprep.subr.mxu0 0.0
    %87 = vmatpush1.xpose.msra.mxu0 0.0
    %88 = vmatprep.subr.mxu0 0.0
    %89 = vmatpush1.xpose.msra.mxu0 0.0
    %90 = vmatprep.subr.mxu0 0.0
    %91 = vmatpush1.xpose.msra.mxu0 0.0
    %92 = vmatprep.subr.mxu0 0.0
    %93 = vmatpush1.xpose.msra.mxu0 0.0
    %94 = vmatprep.subr.mxu0 0.0
    %95 = vmatpush1.xpose.msra.mxu0 0.0
    %96 = vmatprep.subr.mxu0 0.0
    %97 = vmatpush1.xpose.msra.mxu0 0.0
    %98 = vmatprep.subr.mxu0 0.0
    %99 = vmatpush1.xpose.msra.mxu0 0.0
    %100 = vmatprep.subr.mxu0 0.0
    %101 = vmatpush1.xpose.msra.mxu0 0.0
    %102 = vmatprep.subr.mxu0 0.0
    %103 = vmatpush1.xpose.msra.mxu0 0.0
    %104 = vmatprep.subr.mxu0 0.0
    %105 = vmatpush1.xpose.msra.mxu0 0.0
    %106 = vmatprep.subr.mxu0 0.0
    %107 = vmatpush1.xpose.msra.mxu0 0.0
    %108 = vmatprep.subr.mxu0 0.0
    %109 = vmatpush1.xpose.msra.mxu0 0.0
    %110 = vmatprep.subr.mxu0 0.0
    %111 = vmatpush1.xpose.msra.mxu0 0.0
    %112 = vmatprep.subr.mxu0 0.0
    %113 = vmatpush1.xpose.msra.mxu0 0.0
    %114 = vmatprep.subr.mxu0 0.0
    %115 = vmatpush1.xpose.msra.mxu0 0.0
    %116 = vmatprep.subr.mxu0 0.0
    %117 = vmatpush1.xpose.msra.mxu0 0.0
    %118 = vmatprep.subr.mxu0 0.0
    %119 = vmatpush1.xpose.msra.mxu0 0.0
    %120 = vmatprep.subr.mxu0 0.0
    %121 = vmatpush1.xpose.msra.mxu0 0.0
    %122 = vmatprep.subr.mxu0 0.0
    %123 = vmatpush1.xpose.msra.mxu0 0.0
    %124 = vmatprep.mubr.f32.mxu0 1.0
    %125 = vmatmul.mubr.f32.gmra.mrb[0].mxu0 1.0
    %v126 = vpop.f32.mrb[0].mxu0
    %v127 = vadd.f32 0.0, %v126
    %v128 = vpop.f32.mrb[0].mxu0
    %129 = vdwg.mxu0
    %vm130 = vcmask 64512
    %v132 = vsel %vm130, %v45, 0
    %v135 = vsel %vm130, %v127, 0
    %137 = vmatprep.subr.mxu0 0.0
    %138 = vmatpush1.xpose.msra.mxu0 %v135
    %139 = vmatprep.subr.mxu0 0.0
    %140 = vmatpush1.xpose.msra.mxu0 0.0
    %141 = vmatprep.subr.mxu0 0.0
    %142 = vmatpush1.xpose.msra.mxu0 0.0
    %143 = vmatprep.subr.mxu0 0.0
    %144 = vmatpush1.xpose.msra.mxu0 0.0
    %145 = vmatprep.subr.mxu0 0.0
    %146 = vmatpush1.xpose.msra.mxu0 0.0
    %147 = vmatprep.subr.mxu0 0.0
    %148 = vmatpush1.xpose.msra.mxu0 0.0
    %149 = vmatprep.subr.mxu0 0.0
    %150 = vmatpush1.xpose.msra.mxu0 0.0
    %151 = vmatprep.subr.mxu0 0.0
    %152 = vmatpush1.xpose.msra.mxu0 0.0
    %153 = vmatprep.subr.mxu0 0.0
    %154 = vmatpush1.xpose.msra.mxu0 0.0
    %155 = vmatprep.subr.mxu0 0.0
    %156 = vmatpush1.xpose.msra.mxu0 0.0
    %157 = vmatprep.subr.mxu0 0.0
    %158 = vmatpush1.xpose.msra.mxu0 0.0
    %159 = vmatprep.subr.mxu0 0.0
    %160 = vmatpush1.xpose.msra.mxu0 0.0
    %161 = vmatprep.subr.mxu0 0.0
    %162 = vmatpush1.xpose.msra.mxu0 0.0
    %163 = vmatprep.subr.mxu0 0.0
    %164 = vmatpush1.xpose.msra.mxu0 0.0
    %165 = vmatprep.subr.mxu0 0.0
    %166 = vmatpush1.xpose.msra.mxu0 0.0
    %167 = vmatprep.subr.mxu0 0.0
    %168 = vmatpush1.xpose.msra.mxu0 0.0
    %169 = vmatprep.subr.mxu0 0.0
    %170 = vmatpush1.xpose.msra.mxu0 0.0
    %171 = vmatprep.subr.mxu0 0.0
    %172 = vmatpush1.xpose.msra.mxu0 0.0
    %173 = vmatprep.subr.mxu0 0.0
    %174 = vmatpush1.xpose.msra.mxu0 0.0
    %175 = vmatprep.subr.mxu0 0.0
    %176 = vmatpush1.xpose.msra.mxu0 0.0
    %177 = vmatprep.subr.mxu0 0.0
    %178 = vmatpush1.xpose.msra.mxu0 0.0
    %179 = vmatprep.subr.mxu0 0.0
    %180 = vmatpush1.xpose.msra.mxu0 0.0
    %181 = vmatprep.subr.mxu0 0.0
    %182 = vmatpush1.xpose.msra.mxu0 0.0
    %183 = vmatprep.subr.mxu0 0.0
    %184 = vmatpush1.xpose.msra.mxu0 0.0
    %185 = vmatprep.subr.mxu0 0.0
    %186 = vmatpush1.xpose.msra.mxu0 0.0
    %187 = vmatprep.subr.mxu0 0.0
    %188 = vmatpush1.xpose.msra.mxu0 0.0
    %189 = vmatprep.subr.mxu0 0.0
    %190 = vmatpush1.xpose.msra.mxu0 0.0
    %191 = vmatprep.subr.mxu0 0.0
    %192 = vmatpush1.xpose.msra.mxu0 0.0
    %193 = vmatprep.subr.mxu0 0.0
    %194 = vmatpush1.xpose.msra.mxu0 0.0
    %195 = vmatprep.subr.mxu0 0.0
    %196 = vmatpush1.xpose.msra.mxu0 0.0
    %197 = vmatprep.subr.mxu0 0.0
    %198 = vmatpush1.xpose.msra.mxu0 0.0
    %199 = vmatprep.subr.mxu0 0.0
    %200 = vmatpush1.xpose.msra.mxu0 0.0
    %201 = vmatprep.mubr.f32.mxu0 0.0
    %202 = vmatmul.mubr.f32.gmra.mrb[0].mxu0 %v132
    %v203 = vpop.f32.mrb[0].mxu0
    %v204 = vadd.f32 0.0, %v203
    %v205 = vpop.f32.mrb[0].mxu0
    %206 = vdwg.mxu0
    %vm207 = vcmp.gt.f32.partialorder %v204, %v127
    %vm208 = vcmp.eq.f32.partialorder %v204, %v127
    %vm209 = vcmp.lt.s32.totalorder %v40, %v42
    %vm210 = vmand %vm208, %vm209
    %vm211 = vmor %vm207, %vm210
    %v212 = vsel %vm211, 1, 0
    %v213 = vsel %vm130, %v212, 0
    %v214 = vrot.slane %v213, 4
    %v215 = vadd.s32 %v213, %v214
    %v216 = vrot.slane %v215, 2
    %v217 = vadd.s32 %v215, %v216
    %v218 = vrot.slane %v217, 1
    %v219 = vadd.s32 %v217, %v218
    %vm220 = vcmp.lt.s32.totalorder %v219, 6
    %v221 = vsub.s32 %v219, 2
    %v222 = vsel %vm220, %v219, %v221
    %vm223 = vcmp.eq.s32.totalorder %v40, %v222
    %v224 = vsel %vm223, 1, 0
    %v225 = vcvt.s32.f32 %v224
    %v227 = vsel %vm130, %v225, 0
    %229 = vmatprep.subr.mxu0 %v59
    %230 = vmatpush1.msra.mxu0 %v58
    %231 = vmatprep.subr.mxu0 0.0
    %232 = vmatpush1.msra.mxu0 0.0
    %233 = vmatprep.subr.mxu0 0.0
    %234 = vmatpush1.msra.mxu0 0.0
    %235 = vmatprep.subr.mxu0 0.0
    %236 = vmatpush1.msra.mxu0 0.0
    %237 = vmatprep.subr.mxu0 0.0
    %238 = vmatpush1.msra.mxu0 0.0
    %239 = vmatprep.subr.mxu0 0.0
    %240 = vmatpush1.msra.mxu0 0.0
    %241 = vmatprep.subr.mxu0 0.0
    %242 = vmatpush1.msra.mxu0 0.0
    %243 = vmatprep.subr.mxu0 0.0
    %244 = vmatpush1.msra.mxu0 0.0
    %245 = vmatprep.subr.mxu0 0.0
    %246 = vmatpush1.msra.mxu0 0.0
    %247 = vmatprep.subr.mxu0 0.0
    %248 = vmatpush1.msra.mxu0 0.0
    %249 = vmatprep.subr.mxu0 0.0
    %250 = vmatpush1.msra.mxu0 0.0
    %251 = vmatprep.subr.mxu0 0.0
    %252 = vmatpush1.msra.mxu0 0.0
    %253 = vmatprep.subr.mxu0 0.0
    %254 = vmatpush1.msra.mxu0 0.0
    %255 = vmatprep.subr.mxu0 0.0
    %256 = vmatpush1.msra.mxu0 0.0
    %257 = vmatprep.subr.mxu0 0.0
    %258 = vmatpush1.msra.mxu0 0.0
    %259 = vmatprep.subr.mxu0 0.0
    %260 = vmatpush1.msra.mxu0 0.0
    %261 = vmatprep.subr.mxu0 0.0
    %262 = vmatpush1.msra.mxu0 0.0
    %263 = vmatprep.subr.mxu0 0.0
    %264 = vmatpush1.msra.mxu0 0.0
    %265 = vmatprep.subr.mxu0 0.0
    %266 = vmatpush1.msra.mxu0 0.0
    %267 = vmatprep.subr.mxu0 0.0
    %268 = vmatpush1.msra.mxu0 0.0
    %269 = vmatprep.subr.mxu0 0.0
    %270 = vmatpush1.msra.mxu0 0.0
    %271 = vmatprep.subr.mxu0 0.0
    %272 = vmatpush1.msra.mxu0 0.0
    %273 = vmatprep.subr.mxu0 0.0
    %274 = vmatpush1.msra.mxu0 0.0
    %275 = vmatprep.subr.mxu0 0.0
    %276 = vmatpush1.msra.mxu0 0.0
    %277 = vmatprep.subr.mxu0 0.0
    %278 = vmatpush1.msra.mxu0 0.0
    %279 = vmatprep.subr.mxu0 0.0
    %280 = vmatpush1.msra.mxu0 0.0
    %281 = vmatprep.subr.mxu0 0.0
    %282 = vmatpush1.msra.mxu0 0.0
    %283 = vmatprep.subr.mxu0 0.0
    %284 = vmatpush1.msra.mxu0 0.0
    %285 = vmatprep.subr.mxu0 0.0
    %286 = vmatpush1.msra.mxu0 0.0
    %287 = vmatprep.subr.mxu0 0.0
    %288 = vmatpush1.msra.mxu0 0.0
    %289 = vmatprep.subr.mxu0 0.0
    %290 = vmatpush1.msra.mxu0 0.0
    %291 = vmatprep.subr.mxu0 0.0
    %292 = vmatpush1.msra.mxu0 0.0
    %293 = vmatprep.mubr.f32.mxu0 0.0
    %294 = vmatmul.mubr.f32.gmra.mrb[0].mxu0 %v227
    %v295 = vpop.f32.mrb[0].mxu0
    %v296 = vadd.f32 0.0, %v295
    %v297 = vpop.f32.mrb[0].mxu0
    %v298 = vadd.f32 0.0, %v297
    %299 = vdwg.mxu0
    %300 = vst [vmem:[%s2] sm:$0x3f] %v296
    %301 = vst [vmem:[%s2 + $0x8] sm:$0x3f] %v298
    %s302 = scalar_lea.vmem [#allocation3], 8
    %v303 = vld [vmem:[%s302] sm:$0xff]
    %v305 = vcombine.high %v303, %v303
    %307 = vst [vmem:[#allocation2] sm:$0xf] %v303
    %308 = vst [vmem:[#allocation2 + $0x8] sm:$0xf] %v305
    %s309 = scalar_lea.vmem [#allocation5], 8
    %v310 = vld [vmem:[%s309] sm:$0xff]
    %v312 = vcombine.low %v310, %v310
    %314 = vst [vmem:[#allocation2] sm:$0xf0] %v312
    %315 = vst [vmem:[#allocation2 + $0x8] sm:$0xf0] %v310
    %v316 = vld [vmem:[#allocation2] sm:$0xff]
    %v317 = vld [vmem:[#allocation2 + $0x8] sm:$0xff]
    %318 = vmatprep.subr.mxu0 %v317
    %319 = vmatpush1.xpose.msra.mxu0 %v316
    %320 = vmatprep.subr.mxu0 0.0
    %321 = vmatpush1.xpose.msra.mxu0 0.0
    %322 = vmatprep.subr.mxu0 0.0
    %323 = vmatpush1.xpose.msra.mxu0 0.0
    %324 = vmatprep.subr.mxu0 0.0
    %325 = vmatpush1.xpose.msra.mxu0 0.0
    %326 = vmatprep.subr.mxu0 0.0
    %327 = vmatpush1.xpose.msra.mxu0 0.0
    %328 = vmatprep.subr.mxu0 0.0
    %329 = vmatpush1.xpose.msra.mxu0 0.0
    %330 = vmatprep.subr.mxu0 0.0
    %331 = vmatpush1.xpose.msra.mxu0 0.0
    %332 = vmatprep.subr.mxu0 0.0
    %333 = vmatpush1.xpose.msra.mxu0 0.0
    %334 = vmatprep.subr.mxu0 0.0
    %335 = vmatpush1.xpose.msra.mxu0 0.0
    %336 = vmatprep.subr.mxu0 0.0
    %337 = vmatpush1.xpose.msra.mxu0 0.0
    %338 = vmatprep.subr.mxu0 0.0
    %339 = vmatpush1.xpose.msra.mxu0 0.0
    %340 = vmatprep.subr.mxu0 0.0
    %341 = vmatpush1.xpose.msra.mxu0 0.0
    %342 = vmatprep.subr.mxu0 0.0
    %343 = vmatpush1.xpose.msra.mxu0 0.0
    %344 = vmatprep.subr.mxu0 0.0
    %345 = vmatpush1.xpose.msra.mxu0 0.0
    %346 = vmatprep.subr.mxu0 0.0
    %347 = vmatpush1.xpose.msra.mxu0 0.0
    %348 = vmatprep.subr.mxu0 0.0
    %349 = vmatpush1.xpose.msra.mxu0 0.0
    %350 = vmatprep.subr.mxu0 0.0
    %351 = vmatpush1.xpose.msra.mxu0 0.0
    %352 = vmatprep.subr.mxu0 0.0
    %353 = vmatpush1.xpose.msra.mxu0 0.0
    %354 = vmatprep.subr.mxu0 0.0
    %355 = vmatpush1.xpose.msra.mxu0 0.0
    %356 = vmatprep.subr.mxu0 0.0
    %357 = vmatpush1.xpose.msra.mxu0 0.0
    %358 = vmatprep.subr.mxu0 0.0
    %359 = vmatpush1.xpose.msra.mxu0 0.0
    %360 = vmatprep.subr.mxu0 0.0
    %361 = vmatpush1.xpose.msra.mxu0 0.0
    %362 = vmatprep.subr.mxu0 0.0
    %363 = vmatpush1.xpose.msra.mxu0 0.0
    %364 = vmatprep.subr.mxu0 0.0
    %365 = vmatpush1.xpose.msra.mxu0 0.0
    %366 = vmatprep.subr.mxu0 0.0
    %367 = vmatpush1.xpose.msra.mxu0 0.0
    %368 = vmatprep.subr.mxu0 0.0
    %369 = vmatpush1.xpose.msra.mxu0 0.0
    %370 = vmatprep.subr.mxu0 0.0
    %371 = vmatpush1.xpose.msra.mxu0 0.0
    %372 = vmatprep.subr.mxu0 0.0
    %373 = vmatpush1.xpose.msra.mxu0 0.0
    %374 = vmatprep.subr.mxu0 0.0
    %375 = vmatpush1.xpose.msra.mxu0 0.0
    %376 = vmatprep.subr.mxu0 0.0
    %377 = vmatpush1.xpose.msra.mxu0 0.0
    %378 = vmatprep.subr.mxu0 0.0
    %379 = vmatpush1.xpose.msra.mxu0 0.0
    %380 = vmatprep.subr.mxu0 0.0
    %381 = vmatpush1.xpose.msra.mxu0 0.0
    %382 = vmatprep.mubr.f32.mxu0 1.0
    %383 = vmatmul.mubr.f32.gmra.mrb[0].mxu0 1.0
    %v384 = vpop.f32.mrb[0].mxu0
    %v385 = vadd.f32 0.0, %v384
    %v386 = vpop.f32.mrb[0].mxu0
    %387 = vdwg.mxu0
    %v389 = vsel %vm130, %v385, 0
    %391 = vmatprep.subr.mxu0 0.0
    %392 = vmatpush1.xpose.msra.mxu0 %v389
    %393 = vmatprep.subr.mxu0 0.0
    %394 = vmatpush1.xpose.msra.mxu0 0.0
    %395 = vmatprep.subr.mxu0 0.0
    %396 = vmatpush1.xpose.msra.mxu0 0.0
    %397 = vmatprep.subr.mxu0 0.0
    %398 = vmatpush1.xpose.msra.mxu0 0.0
    %399 = vmatprep.subr.mxu0 0.0
    %400 = vmatpush1.xpose.msra.mxu0 0.0
    %401 = vmatprep.subr.mxu0 0.0
    %402 = vmatpush1.xpose.msra.mxu0 0.0
    %403 = vmatprep.subr.mxu0 0.0
    %404 = vmatpush1.xpose.msra.mxu0 0.0
    %405 = vmatprep.subr.mxu0 0.0
    %406 = vmatpush1.xpose.msra.mxu0 0.0
    %407 = vmatprep.subr.mxu0 0.0
    %408 = vmatpush1.xpose.msra.mxu0 0.0
    %409 = vmatprep.subr.mxu0 0.0
    %410 = vmatpush1.xpose.msra.mxu0 0.0
    %411 = vmatprep.subr.mxu0 0.0
    %412 = vmatpush1.xpose.msra.mxu0 0.0
    %413 = vmatprep.subr.mxu0 0.0
    %414 = vmatpush1.xpose.msra.mxu0 0.0
    %415 = vmatprep.subr.mxu0 0.0
    %416 = vmatpush1.xpose.msra.mxu0 0.0
    %417 = vmatprep.subr.mxu0 0.0
    %418 = vmatpush1.xpose.msra.mxu0 0.0
    %419 = vmatprep.subr.mxu0 0.0
    %420 = vmatpush1.xpose.msra.mxu0 0.0
    %421 = vmatprep.subr.mxu0 0.0
    %422 = vmatpush1.xpose.msra.mxu0 0.0
    %423 = vmatprep.subr.mxu0 0.0
    %424 = vmatpush1.xpose.msra.mxu0 0.0
    %425 = vmatprep.subr.mxu0 0.0
    %426 = vmatpush1.xpose.msra.mxu0 0.0
    %427 = vmatprep.subr.mxu0 0.0
    %428 = vmatpush1.xpose.msra.mxu0 0.0
    %429 = vmatprep.subr.mxu0 0.0
    %430 = vmatpush1.xpose.msra.mxu0 0.0
    %431 = vmatprep.subr.mxu0 0.0
    %432 = vmatpush1.xpose.msra.mxu0 0.0
    %433 = vmatprep.subr.mxu0 0.0
    %434 = vmatpush1.xpose.msra.mxu0 0.0
    %435 = vmatprep.subr.mxu0 0.0
    %436 = vmatpush1.xpose.msra.mxu0 0.0
    %437 = vmatprep.subr.mxu0 0.0
    %438 = vmatpush1.xpose.msra.mxu0 0.0
    %439 = vmatprep.subr.mxu0 0.0
    %440 = vmatpush1.xpose.msra.mxu0 0.0
    %441 = vmatprep.subr.mxu0 0.0
    %442 = vmatpush1.xpose.msra.mxu0 0.0
    %443 = vmatprep.subr.mxu0 0.0
    %444 = vmatpush1.xpose.msra.mxu0 0.0
    %445 = vmatprep.subr.mxu0 0.0
    %446 = vmatpush1.xpose.msra.mxu0 0.0
    %447 = vmatprep.subr.mxu0 0.0
    %448 = vmatpush1.xpose.msra.mxu0 0.0
    %449 = vmatprep.subr.mxu0 0.0
    %450 = vmatpush1.xpose.msra.mxu0 0.0
    %451 = vmatprep.subr.mxu0 0.0
    %452 = vmatpush1.xpose.msra.mxu0 0.0
    %453 = vmatprep.subr.mxu0 0.0
    %454 = vmatpush1.xpose.msra.mxu0 0.0
    %455 = vmatprep.mubr.f32.mxu0 0.0
    %456 = vmatmul.mubr.f32.gmra.mrb[0].mxu0 %v132
    %v457 = vpop.f32.mrb[0].mxu0
    %v458 = vadd.f32 0.0, %v457
    %v459 = vpop.f32.mrb[0].mxu0
    %460 = vdwg.mxu0
    %vm461 = vcmp.gt.f32.partialorder %v458, %v385
    %vm462 = vcmp.eq.f32.partialorder %v458, %v385
    %vm463 = vmand %vm462, %vm209
    %vm464 = vmor %vm461, %vm463
    %v465 = vsel %vm464, 1, 0
    %v466 = vsel %vm130, %v465, 0
    %v467 = vrot.slane %v466, 4
    %v468 = vadd.s32 %v466, %v467
    %v469 = vrot.slane %v468, 2
    %v470 = vadd.s32 %v468, %v469
    %v471 = vrot.slane %v470, 1
    %v472 = vadd.s32 %v470, %v471
    %vm473 = vcmp.lt.s32.totalorder %v472, 6
    %v474 = vsub.s32 %v472, 2
    %v475 = vsel %vm473, %v472, %v474
    %vm476 = vcmp.eq.s32.totalorder %v40, %v475
    %v477 = vsel %vm476, 1, 0
    %v478 = vcvt.s32.f32 %v477
    %v480 = vsel %vm130, %v478, 0
    %482 = vmatprep.subr.mxu0 %v317
    %483 = vmatpush1.msra.mxu0 %v316
    %484 = vmatprep.subr.mxu0 0.0
    %485 = vmatpush1.msra.mxu0 0.0
    %486 = vmatprep.subr.mxu0 0.0
    %487 = vmatpush1.msra.mxu0 0.0
    %488 = vmatprep.subr.mxu0 0.0
    %489 = vmatpush1.msra.mxu0 0.0
    %490 = vmatprep.subr.mxu0 0.0
    %491 = vmatpush1.msra.mxu0 0.0
    %492 = vmatprep.subr.mxu0 0.0
    %493 = vmatpush1.msra.mxu0 0.0
    %494 = vmatprep.subr.mxu0 0.0
    %495 = vmatpush1.msra.mxu0 0.0
    %496 = vmatprep.subr.mxu0 0.0
    %497 = vmatpush1.msra.mxu0 0.0
    %498 = vmatprep.subr.mxu0 0.0
    %499 = vmatpush1.msra.mxu0 0.0
    %500 = vmatprep.subr.mxu0 0.0
    %501 = vmatpush1.msra.mxu0 0.0
    %502 = vmatprep.subr.mxu0 0.0
    %503 = vmatpush1.msra.mxu0 0.0
    %504 = vmatprep.subr.mxu0 0.0
    %505 = vmatpush1.msra.mxu0 0.0
    %506 = vmatprep.subr.mxu0 0.0
    %507 = vmatpush1.msra.mxu0 0.0
    %508 = vmatprep.subr.mxu0 0.0
    %509 = vmatpush1.msra.mxu0 0.0
    %510 = vmatprep.subr.mxu0 0.0
    %511 = vmatpush1.msra.mxu0 0.0
    %512 = vmatprep.subr.mxu0 0.0
    %513 = vmatpush1.msra.mxu0 0.0
    %514 = vmatprep.subr.mxu0 0.0
    %515 = vmatpush1.msra.mxu0 0.0
    %516 = vmatprep.subr.mxu0 0.0
    %517 = vmatpush1.msra.mxu0 0.0
    %518 = vmatprep.subr.mxu0 0.0
    %519 = vmatpush1.msra.mxu0 0.0
    %520 = vmatprep.subr.mxu0 0.0
    %521 = vmatpush1.msra.mxu0 0.0
    %522 = vmatprep.subr.mxu0 0.0
    %523 = vmatpush1.msra.mxu0 0.0
    %524 = vmatprep.subr.mxu0 0.0
    %525 = vmatpush1.msra.mxu0 0.0
    %526 = vmatprep.subr.mxu0 0.0
    %527 = vmatpush1.msra.mxu0 0.0
    %528 = vmatprep.subr.mxu0 0.0
    %529 = vmatpush1.msra.mxu0 0.0
    %530 = vmatprep.subr.mxu0 0.0
    %531 = vmatpush1.msra.mxu0 0.0
    %532 = vmatprep.subr.mxu0 0.0
    %533 = vmatpush1.msra.mxu0 0.0
    %534 = vmatprep.subr.mxu0 0.0
    %535 = vmatpush1.msra.mxu0 0.0
    %536 = vmatprep.subr.mxu0 0.0
    %537 = vmatpush1.msra.mxu0 0.0
    %538 = vmatprep.subr.mxu0 0.0
    %539 = vmatpush1.msra.mxu0 0.0
    %540 = vmatprep.subr.mxu0 0.0
    %541 = vmatpush1.msra.mxu0 0.0
    %542 = vmatprep.subr.mxu0 0.0
    %543 = vmatpush1.msra.mxu0 0.0
    %544 = vmatprep.subr.mxu0 0.0
    %545 = vmatpush1.msra.mxu0 0.0
    %546 = vmatprep.mubr.f32.mxu0 0.0
    %547 = vmatmul.mubr.f32.gmra.mrb[0].mxu0 %v480
    %v548 = vpop.f32.mrb[0].mxu0
    %v549 = vadd.f32 0.0, %v548
    %v550 = vpop.f32.mrb[0].mxu0
    %v551 = vadd.f32 0.0, %v550
    %552 = vdwg.mxu0
    %s553 = scalar_lea.vmem %s2, 16
    %554 = vst [vmem:[%s553] sm:$0x3f] %v549
    %555 = vst [vmem:[%s553 + $0x8] sm:$0x3f] %v551
    // Predicated region
    $region18: #{tpu_custom_call.1} parent=1 // pred_check
      _
    $region19: #{tpu_custom_call.1} parent=1 // pred_check_branch
      %557 = sbr.rel (0) target = $region21
    $region20: #{tpu_custom_call.1} parent=1 // pred_region
      _
    $region21: #{tpu_custom_call.1} parent=1 // pred_fallthru
      _
    // Predicated region
    $region22: #{tpu_custom_call.1} parent=1 // pred_check
      _
    $region23: #{tpu_custom_call.1} parent=1 // pred_check_branch
      %559 = sbr.rel (0) target = $region25
    $region24: #{tpu_custom_call.1} parent=1 // pred_region
      _
    $region25: #{tpu_custom_call.1} parent=1 // pred_fallthru
      _
    %560 = vsyncpa [#allocation4], 1
    %561 = vsyncpa [#allocation6], 1

</llo_original>
